<compile_context>
chip_gen: v5e
topology: v5e:2x2
jax: 0.10.0
libtpu: 0.0.40
codegen_flags: <defaults>
</compile_context>

<pallas_src>
import functools

import jax
import jax.numpy as jnp
import numpy as np
from jax.experimental import pallas as pl
from jax.experimental.pallas import tpu as pltpu


def _round_up(x, m):
    return ((x + m - 1) // m) * m


def _vmem_sizes():
    """Per-generation scoped-VMEM (budget_for_blocks, mosaic_limit) in bytes."""
    phys = 64 * 1024 * 1024  # conservative default (v7x per-TC physical VMEM)
    try:
        info = pltpu.get_tpu_info()
        phys = int(getattr(info, "vmem_capacity_bytes", phys)) or phys
    except Exception:
        pass
    limit = (phys * 13) // 16   # ~81%: ~104 MiB on v5e/v6e, ~52 MiB on v7x
    budget = (phys * 11) // 16  # ~69%: ~88 MiB on v5e/v6e, ~44 MiB on v7x
    return budget, limit


def _onehot_kernel(x_ref, sel_ref, cls_ref, o_ref, *, precision):
    # x_ref:   (TB, F)   int32  -> cast to sel dtype (bf16 or f32) for the MXU
    # sel_ref: (F, TN)   bf16/f32 static selection matrix
    # cls_ref: (1, TN)   f32     static class index per output column
    # o_ref:   (TB, TN)  int8 (default) / int32 one-hot block
    xw = x_ref[...].astype(sel_ref.dtype)
    g = jnp.dot(xw, sel_ref[...],
                preferred_element_type=jnp.float32,
                precision=precision)
    o_ref[...] = (g == cls_ref[...]).astype(o_ref.dtype)


def make_one_hot_encoder(cardinalities, out_dtype=jnp.int8, max_col_tile=2048):
    """Returns a callable x:(..., F) int -> (..., sum(cards)) out_dtype."""
    cards = [int(c) for c in cardinalities]
    num_feat = len(cards)
    assert num_feat >= 1
    total = int(sum(cards))
    max_card = max(cards)
    # The f32 comparison path is only exact for integers < 2^24.
    assert max_card < (1 << 24), "cardinality too large for exact f32 compare"

    # bf16 is exact for integers <= 256 -> single native MXU pass; otherwise
    # stay f32 with HIGHEST precision so g == cls stays exact.
    use_bf16 = max_card <= 256
    sel_dtype = jnp.bfloat16 if use_bf16 else jnp.float32
    precision = None if use_bf16 else jax.lax.Precision.HIGHEST

    # Static "parameters" derived from the cardinalities buffer (exact width,
    # no lane padding -> no wrapper slice of the output).
    offsets = np.cumsum([0] + cards[:-1])
    sel_np = np.zeros((num_feat, total), dtype=np.float32)
    cls_np = np.full((1, total), -1.0, dtype=np.float32)
    for j, (c, off) in enumerate(zip(cards, offsets)):
        sel_np[j, off:off + c] = 1.0
        cls_np[0, off:off + c] = np.arange(c, dtype=np.float32)
    sel = jnp.asarray(sel_np, dtype=sel_dtype)
    cls = jnp.asarray(cls_np, dtype=jnp.float32)

    out_bytes = jnp.dtype(out_dtype).itemsize
    sel_bytes = jnp.dtype(sel_dtype).itemsize
    sub = {1: 32, 2: 16, 4: 8}.get(out_bytes, 8)      # output sublane tiling
    sel_sub = 16 if sel_bytes == 2 else 8

    vmem_budget, vmem_limit = _vmem_sizes()

    # ---- column tiling ------------------------------------------------------
    # Small encoders: one full-extent column block (block last dim == array dim
    # is allowed), stores are masked only in the trailing partial lane group.
    # Wide encoders: 128-aligned column tiles on a second "parallel" grid axis.
    tile_n = total if total <= max_col_tile else max_col_tile

    def _fixed_bytes(tn):
        n_lanes = _round_up(tn, 128)
        return (2 * _round_up(num_feat, sel_sub) * n_lanes * sel_bytes   # sel x2 buf
                + 2 * 8 * n_lanes * 4)                                   # cls x2 buf

    # Shrink the column tile if resident sel/cls would eat the VMEM budget.
    while tile_n > 128 and _fixed_bytes(tile_n) > vmem_budget // 2:
        tile_n = max(128, _round_up(tile_n // 2, 128))
    grid_n = pl.cdiv(total, tile_n)

    n_lanes = _round_up(tile_n, 128)
    f_lanes = _round_up(num_feat, 128)     # x block lane padding in VMEM
    fixed = _fixed_bytes(tile_n)
    per_row = (2 * f_lanes * 4                  # x block, int32, x2 buffers
               + f_lanes * sel_bytes            # xw cast temporary
               + 2 * n_lanes * out_bytes        # output block, x2 buffers
               + n_lanes * (4 + 1 + out_bytes))  # g (f32) + mask + cast temps

    def _pick_tb(b):
        avail = max(vmem_budget - fixed, per_row * sub)
        tb = max(sub, (avail // per_row) // sub * sub)
        # Keep per-step output blocks <= ~8 MiB (per-step overhead amortized
        # well before that; beyond it only VMEM pressure grows).
        out_cap = max(sub, ((8 << 20) // max(tile_n * out_bytes, 1)) // sub * sub)
        tb = min(tb, out_cap)
        tb = min(tb, _round_up(b, sub))
        # Guarantee >=2 grid steps (when the batch allows) so both v7x
        # TensorCores get work; harmless on single-TC generations.
        if grid_n == 1 and b > sub:
            tb = min(tb, _round_up(pl.cdiv(b, 2), sub))
        return max(sub, tb)

    kernel = functools.partial(_onehot_kernel, precision=precision)

    @jax.jit
    def encode(x):
        orig_shape = x.shape
        assert orig_shape[-1] == num_feat
        x2 = x.reshape(-1, num_feat).astype(jnp.int32)
        b = x2.shape[0]
        tb = _pick_tb(b)
        grid_b = pl.cdiv(b, tb)   # ragged last block masked by Pallas

        cost = pl.CostEstimate(
            flops=2 * b * num_feat * total,
            transcendentals=0,
            bytes_accessed=(b * num_feat * 4 + b * total * out_bytes
                            + num_feat * total * sel_bytes + total * 4))

        out = pl.pallas_call(
            kernel,
            out_shape=jax.ShapeDtypeStruct((b, total), out_dtype),
            grid_spec=pltpu.PrefetchScalarGridSpec(
                num_scalar_prefetch=0,
                grid=(grid_b, grid_n),
                in_specs=[
                    pl.BlockSpec((tb, num_feat), lambda i, j: (i, 0)),
                    pl.BlockSpec((num_feat, tile_n), lambda i, j: (0, j)),
                    pl.BlockSpec((1, tile_n), lambda i, j: (0, j)),
                ],
                out_specs=pl.BlockSpec((tb, tile_n), lambda i, j: (i, j)),
            ),
            compiler_params=pltpu.CompilerParams(
                dimension_semantics=("parallel", "parallel"),
                vmem_limit_bytes=vmem_limit),
            cost_estimate=cost,
        )(x2, sel, cls)

        return out.reshape(*orig_shape[:-1], total)

    return encode


if __name__ == "__main__":
    cardinalities = [3, 5, 7, 9]
    total = sum(cardinalities)
    key = jax.random.PRNGKey(0)

    def ref_encode(x):
        # Mirrors F.one_hot + torch.cat semantics (values; dtype is int on TPU).
        return jnp.concatenate(
            [jax.nn.one_hot(x[..., j], c, dtype=jnp.int32)
             for j, c in enumerate(cardinalities)],
            axis=-1)

    encoder = make_one_hot_encoder(cardinalities)            # int8 output (default)
    encoder32 = make_one_hot_encoder(cardinalities, out_dtype=jnp.int32)

    # Test 1: plain 2-D batch (16, 4).
    cols = []
    for c in cardinalities:
        key, k2 = jax.random.split(key)
        cols.append(jax.random.randint(k2, (16, 1), 0, c, dtype=jnp.int32))
    x1 = jnp.concatenate(cols, axis=-1)
    out1 = jax.block_until_ready(encoder(x1))
    assert out1.shape == (16, total), out1.shape
    assert out1.dtype == jnp.int8
    np.testing.assert_array_equal(np.asarray(out1, dtype=np.int32),
                                  np.asarray(ref_encode(x1)))

    # Test 2: 3-D leading dims whose flattened batch (18) is not a multiple of
    # the sublane tile, exercising the ragged-last-block masked-store path.
    cols = []
    for c in cardinalities:
        key, k2 = jax.random.split(key)
        cols.append(jax.random.randint(k2, (2, 9, 1), 0, c, dtype=jnp.int32))
    x2 = jnp.concatenate(cols, axis=-1)
    out2 = jax.block_until_ready(encoder(x2))
    assert out2.shape == (2, 9, total), out2.shape
    np.testing.assert_array_equal(np.asarray(out2, dtype=np.int32),
                                  np.asarray(ref_encode(x2)))

    # Test 3: int32 output variant (wider dtype for downstream consumers).
    out3 = jax.block_until_ready(encoder32(x1))
    assert out3.dtype == jnp.int32
    np.testing.assert_array_equal(np.asarray(out3), np.asarray(ref_encode(x1)))

    print("KERNEL_OK")
</pallas_src>

<mosaic_0001>
module attributes {stable_mosaic.version = 11 : i64} {
  func.func @_onehot_kernel(%arg0: i32, %arg1: i32, %arg2: memref<32x4xi32, #tpu.memory_space<vmem>>, %arg3: memref<4x24xbf16, #tpu.memory_space<vmem>>, %arg4: memref<1x24xf32, #tpu.memory_space<vmem>>, %arg5: memref<32x24xi8, #tpu.memory_space<vmem>>) attributes {dimension_semantics = [#tpu.dimension_semantics<parallel>, #tpu.dimension_semantics<parallel>], iteration_bounds = array<i64: 1, 1>, scalar_prefetch = 0 : i64, scratch_operands = 0 : i64, tpu.core_type = #tpu.core_type<tc>, window_params = [{transform_indices = @transform_0, window_bounds = array<i64: 32, 4>}, {transform_indices = @transform_1, window_bounds = array<i64: 4, 24>}, {transform_indices = @transform_2, window_bounds = array<i64: 1, 24>}, {transform_indices = @transform_3, window_bounds = array<i64: 32, 24>}]} {
    %c0 = arith.constant 0 : index
    %c0_0 = arith.constant 0 : index
    %0 = vector.load %arg2[%c0, %c0_0] : memref<32x4xi32, #tpu.memory_space<vmem>>, vector<32x4xi32>
    %1 = arith.sitofp %0 : vector<32x4xi32> to vector<32x4xbf16>
    %c0_1 = arith.constant 0 : index
    %c0_2 = arith.constant 0 : index
    %2 = vector.load %arg3[%c0_1, %c0_2] : memref<4x24xbf16, #tpu.memory_space<vmem>>, vector<4x24xbf16>
    %cst = arith.constant dense<0.000000e+00> : vector<32x24xf32>
    %3 = tpu.matmul %1, %2, %cst {dimension_numbers = #tpu.dot_dimension_numbers<[1], [0], [0], [1], [0, 0, 1, 1], [], []>} : vector<32x4xbf16>, vector<4x24xbf16>, vector<32x24xf32> -> vector<32x24xf32>
    %c0_3 = arith.constant 0 : index
    %c0_4 = arith.constant 0 : index
    %4 = vector.load %arg4[%c0_3, %c0_4] : memref<1x24xf32, #tpu.memory_space<vmem>>, vector<1x24xf32>
    %5 = vector.broadcast %4 : vector<1x24xf32> to vector<32x24xf32>
    %6 = arith.cmpf oeq, %3, %5 : vector<32x24xf32>
    %7 = arith.extui %6 : vector<32x24xi1> to vector<32x24xi8>
    %c0_5 = arith.constant 0 : index
    %c0_6 = arith.constant 0 : index
    %8 = vector.load %arg5[%c0_5, %c0_6] : memref<32x24xi8, #tpu.memory_space<vmem>>, vector<32x24xi8>
    tpu.vector_store %arg5[%c0_5, %c0_6], %7 {strides = array<i32>} : memref<32x24xi8, #tpu.memory_space<vmem>>, vector<32x24xi8>,
    return
  }
  func.func @transform_0(%arg0: i32, %arg1: i32) -> (i32, i32) {
    %c0_i32 = arith.constant 0 : i32
    %c0_i32_0 = arith.constant 0 : i32
    return %arg0, %c0_i32 : i32, i32
  }
  func.func @transform_1(%arg0: i32, %arg1: i32) -> (i32, i32) {
    %c0_i32 = arith.constant 0 : i32
    %c0_i32_0 = arith.constant 0 : i32
    return %c0_i32, %arg1 : i32, i32
  }
  func.func @transform_2(%arg0: i32, %arg1: i32) -> (i32, i32) {
    %c0_i32 = arith.constant 0 : i32
    %c0_i32_0 = arith.constant 0 : i32
    return %c0_i32, %arg1 : i32, i32
  }
  func.func @transform_3(%arg0: i32, %arg1: i32) -> (i32, i32) {
    %c0_i32 = arith.constant 0 : i32
    return %arg0, %arg1 : i32, i32
  }
}

</mosaic_0001>

<llo_original>
// kernel: encode.1
$region0: #{encode.1}
  #allocation0 [shape = 'u32[]', space=smem, size = 0x4, offset = 0x4, fixed_abs, tag = 'smem constant byte address 0x4 - core index']
  #allocation1 [shape = 'u32[72,128]{1,0:T(1,128)}', space=vmem, size = 0x9000, scoped, tag = 'internal scratch']
  %s0 = inlined_call_operand.vmem [shape: s32[16,4], index: 0, kind: input, shape index: {}]
  %s1 = inlined_call_operand.vmem [shape: bf16[4,24], index: 1, kind: input, shape index: {}]
  %s2 = inlined_call_operand.vmem [shape: f32[1,24], index: 2, kind: input, shape index: {}]
  %s3 = inlined_call_operand.hbm [shape: s8[16,24], index: 3, kind: output, shape index: {}]
  %s4 = sld [smem:[#allocation0]]
  $region22: #{encode.1} parent=0
    _
  %s6 = ssub.s32 1, %s4
  %s7 = scalar_select 0, %s6, %s4
  $region1: #{encode.1} parent=0
    #allocation2 [shape = 'u8[4096]{0}', space=vmem, size = 0x1000, scoped, tag = 'output window, operand 0, single buffered']
    #allocation3 [shape = 's32[1]{0}', space=sflag, size = 0x4, scoped, tag = 'scoped memory for encode.1']
    %8 = vsyncpa [#allocation3], 0
    // Predicated region
    $region2: #{encode.1} parent=1 // pred_check
      _
    $region3: #{encode.1} parent=1 // pred_check_branch
      %10 = sbr.rel (0) target = $region5
    $region4: #{encode.1} parent=1 // pred_region
      _
    $region5: #{encode.1} parent=1 // pred_fallthru
      _
    // Predicated region
    $region6: #{encode.1} parent=1 // pred_check
      _
    $region7: #{encode.1} parent=1 // pred_check_branch
      %12 = sbr.rel (0) target = $region9
    $region8: #{encode.1} parent=1 // pred_region
      _
    $region9: #{encode.1} parent=1 // pred_fallthru
      _
    // Predicated region
    $region10: #{encode.1} parent=1 // pred_check
      _
    $region11: #{encode.1} parent=1 // pred_check_branch
      %14 = sbr.rel (0) target = $region13
    $region12: #{encode.1} parent=1 // pred_region
      _
    $region13: #{encode.1} parent=1 // pred_fallthru
      _
    %v18 = vld [vmem:[%s0] sm:$0xff]
    %v19 = vld [vmem:[%s0 + $0x8] sm:$0xff]
    %v20 = vld [vmem:[%s0 + $0x10] sm:$0xff]
    %v21 = vld [vmem:[%s0 + $0x18] sm:$0xff]
    %v22 = vcvt.s32.f32 %v18
    %v23 = vcvt.s32.f32 %v19
    %v24 = vcvt.s32.f32 %v20
    %v25 = vcvt.s32.f32 %v21
    %v26 = vpack.c.bf16 %v23, %v22
    %v27 = vpack.c.bf16 %v25, %v24
    %v28 = vld [vmem:[%s1] sm:$0x3]
    %vm29 = vcmask 31744
    %v31 = vsel %vm29, %v26, 0
    %v34 = vsel %vm29, %v27, 0
    %vm36 = vcmask 1041408
    %v38 = vsel %vm36, %v28, 0
    %40 = vmatpush.bf16.msra.mxu0 0
    %41 = vmatpush.bf16.msra.mxu0 0
    %42 = vmatpush.bf16.msra.mxu0 0
    %43 = vmatpush.bf16.msra.mxu0 0
    %44 = vmatpush.bf16.msra.mxu0 0
    %45 = vmatpush.bf16.msra.mxu0 0
    %46 = vmatpush.bf16.msra.mxu0 0
    %47 = vmatpush.bf16.msra.mxu0 %v38
    %48 = vmatmul.bf16.gmra.mxu0 %v31
    %v49 = vpop.f32.mrf.mxu0
    %v50 = vadd.f32 0.0, %v49
    %v51 = vpop.f32.mrf.mxu0
    %v52 = vadd.f32 0.0, %v51
    %53 = vmatmul.bf16.gmra.mxu0 %v34
    %v54 = vpop.f32.mrf.mxu0
    %v55 = vadd.f32 0.0, %v54
    %v56 = vpop.f32.mrf.mxu0
    %v57 = vadd.f32 0.0, %v56
    %58 = vdwg.mxu0
    %v59 = vld [vmem:[%s2] sm:$0x1]
    %v61 = vperm.slane %v59, 0
    %vm63 = vcmp.eq.f32.partialorder %v50, %v61
    %vm64 = vcmp.eq.f32.partialorder %v52, %v61
    %vm65 = vcmp.eq.f32.partialorder %v55, %v61
    %vm66 = vcmp.eq.f32.partialorder %v57, %v61
    %vm67 = vmpackc.low %vm64, %vm63
    %vm68 = vmpackc.low %vm66, %vm65
    %v69 = vsel %vm67, 16711935, 0
    %v70 = vsel %vm68, 16711935, 0
    %v71 = vpack.c.b8 %v70, %v69
    %vm72 = vnez %v71
    %v73 = vsel %vm72, 16843009, 0
    %v74 = vunpack.c.0.s8 %v73
    %v75 = vunpack.c.1.s8 %v73
    %v76 = vunpack.c.2.s8 %v73
    %v77 = vunpack.c.3.s8 %v73
    %v78 = vpack.c.b16 %v74, %v74
    %v79 = vpack.c.b8 %v78, %v78
    %v80 = vpack.c.b16 %v75, %v75
    %v81 = vpack.c.b8 %v80, %v80
    %v82 = vpack.c.b16 %v76, %v76
    %v83 = vpack.c.b8 %v82, %v82
    %v84 = vpack.c.b16 %v77, %v77
    %v85 = vpack.c.b8 %v84, %v84
    %vm86 = vcmask 189440
    %87 = vst.msk [vmem:[#allocation2] sm:$0x3] %vm86, %v79
    %88 = vst.msk [vmem:[#allocation2 + $0x2] sm:$0x3] %vm86, %v81
    %89 = vst.msk [vmem:[#allocation2 + $0x4] sm:$0x3] %vm86, %v83
    %90 = vst.msk [vmem:[#allocation2 + $0x6] sm:$0x3] %vm86, %v85
    // Predicated region
    $region14: #{encode.1} parent=1 // pred_check
      _
    $region15: #{encode.1} parent=1 // pred_check_branch
      %92 = sbr.rel (0) target = $region17
    $region16: #{encode.1} parent=1 // pred_region
      %94 = vsyncadd [#allocation3], 64
      %s95 = sshll.u32 [#allocation2], 4
      %s96 = int_to_ptr.vmem [resolvable:$true] %s95
      %s97 = sshll.u32 %s3, 4
      %s98 = int_to_ptr.hbm [resolvable:$true] %s97
      %103 = dma.vmem_to_hbm [thread:$0]  %s96, 64, %s98, [#allocation3], 32, 32, 2
    $region17: #{encode.1} parent=1 // pred_fallthru
      _
    // Predicated region
    $region18: #{encode.1} parent=1 // pred_check
      _
    $region19: #{encode.1} parent=1 // pred_check_branch
      %105 = sbr.rel (0) target = $region21
    $region20: #{encode.1} parent=1 // pred_region
      %107 = dma.done [#allocation3], 128
    $region21: #{encode.1} parent=1 // pred_fallthru
      _
    %108 = vsyncpa [#allocation3], 1

</llo_original>
